<compile_context>
chip_gen: v7x
topology: tpu7x:2x2x1
jax: 0.10.0
libtpu: 0.0.40
codegen_flags: <defaults>
</compile_context>

<pallas_src>
import functools

import jax
import jax.numpy as jnp
import numpy as np
from jax.experimental import pallas as pl
from jax.experimental.pallas import tpu as pltpu

NORM_EPS = 1e-12   # F.normalize default eps
PD_EPS = 1e-6      # F.pairwise_distance default eps (added to the difference)


def _triplet_dist_kernel(xa_ref, xp_ref, out_ref, *, use_bf16_gram):
    """One anchor-row tile: L2-normalize, mine hardest negative, emit (2, TM) dists."""
    i = pl.program_id(0)

    xa = xa_ref[...]                          # (TM, 2, D) rows of x for this tile
    xp = xp_ref[...]                          # (N,  2, D) full x (const index_map -> DMA'd once)
    a = xa[:, 0, :].astype(jnp.float32)       # (TM, D) tile anchors
    p_t = xa[:, 1, :].astype(jnp.float32)     # (TM, D) tile positives (for pos_dist)
    p = xp[:, 1, :].astype(jnp.float32)       # (N,  D) all positives (for mining)
    tm, d = a.shape
    n = p.shape[0]

    # --- F.normalize(x, p=2, dim=1): x / max(||x||_2, eps) ---------------------
    def l2n(v):
        return v / jnp.maximum(jnp.sqrt(jnp.sum(v * v, axis=1, keepdims=True)), NORM_EPS)

    a_n, p_n, p_t_n = l2n(a), l2n(p), l2n(p_t)

    # --- squared pairwise distance (torch adds eps to the difference) ----------
    # dist2[r, j] = ||a_r - p_j + eps||^2
    #             = ||a_r||^2 + ||p_j||^2 - 2 a_r.p_j + 2*eps*(sum a_r - sum p_j) + D*eps^2
    if use_bf16_gram:
        # full-rate MXU path; may flip hard-negative ties vs f32 (see notes)
        gram = jnp.dot(a_n.astype(jnp.bfloat16), p_n.T.astype(jnp.bfloat16),
                       preferred_element_type=jnp.float32)
    else:
        gram = jnp.dot(a_n, p_n.T, preferred_element_type=jnp.float32)   # (TM, N) MXU
    ra = jnp.sum(a_n * a_n, axis=1, keepdims=True)                       # (TM, 1)
    rp = jnp.sum(p_n * p_n, axis=1, keepdims=True).T                     # (1, N)
    sa = jnp.sum(a_n, axis=1, keepdims=True)                             # (TM, 1)
    sp = jnp.sum(p_n, axis=1, keepdims=True).T                           # (1, N)
    dist2 = ra + rp - 2.0 * gram + 2.0 * PD_EPS * (sa - sp) + d * PD_EPS * PD_EPS

    # --- hard-negative mining: min_{j != global row} dist2 ---------------------
    # The mined distance IS the negative distance -> no gather / one-hot matmul.
    row = jax.lax.broadcasted_iota(jnp.int32, (tm, n), 0) + i * tm
    col = jax.lax.broadcasted_iota(jnp.int32, (tm, n), 1)
    neg_d2 = jnp.min(jnp.where(row == col, jnp.inf, dist2), axis=1, keepdims=True)
    neg_dist = jnp.sqrt(jnp.maximum(neg_d2, 0.0))                        # clamp: cancellation

    # --- positive pairwise distance (exact torch form) --------------------------
    dpos = a_n - p_t_n + PD_EPS
    pos_dist = jnp.sqrt(jnp.sum(dpos * dpos, axis=1, keepdims=True))     # (TM, 1)

    # --- lane-dense writeback: (2, TM) rows, one XLU transpose ------------------
    out_ref[...] = jnp.concatenate([pos_dist, neg_dist], axis=1).T       # (2, TM)


def triplet_loss_forward(x, margin=0.0, use_bf16_gram=False):
    """x: (N, 2, D). Returns (nloss, eer_percent) like the torch module's forward."""
    n, two, d = x.shape
    assert two == 2
    assert n >= 2, "need at least 2 pairs for hard-negative mining"

    tm = n if n <= 128 else 128
    assert n % tm == 0, "batch size must be a multiple of 128 for the tiled path"

    kernel = functools.partial(_triplet_dist_kernel, use_bf16_gram=use_bf16_gram)
    dists = pl.pallas_call(
        kernel,
        out_shape=jax.ShapeDtypeStruct((2, n), jnp.float32),
        grid=(n // tm,),
        in_specs=[
            # anchor-tile view of x: one TM-row slab per grid step
            pl.BlockSpec((tm, 2, d), lambda i: (i, 0, 0)),
            # full view of x: constant block index -> fetched into VMEM once
            pl.BlockSpec((n, 2, d), lambda i: (0, 0, 0)),
        ],
        out_specs=pl.BlockSpec((2, tm), lambda i: (0, i)),
        compiler_params=pltpu.CompilerParams(
            dimension_semantics=("parallel",),      # shards row tiles across TCs (v7x)
            vmem_limit_bytes=48 * 1024 * 1024,      # safe on v5e/v6e/v7x
        ),
    )(x, x)

    pos_dist = dists[0]                              # (N,)
    neg_dist = dists[1]                              # (N,)

    # --- hinge loss on host-side jnp (N elements; avoids per-margin recompile) --
    nloss = jnp.mean(
        jnp.maximum(pos_dist * pos_dist - neg_dist * neg_dist + jnp.float32(margin), 0.0)
    )

    # --- host-side EER (stand-in for external tuneThresholdfromScore) -----------
    scores = -np.concatenate([np.asarray(pos_dist), np.asarray(neg_dist)], axis=0)
    labels = np.array([1] * n + [0] * n)
    eer = _compute_eer(scores, labels)
    return nloss, jnp.asarray(eer, dtype=jnp.float32)


def _compute_eer(scores, labels):
    """Vectorized ROC-based EER in percent (max(FAR, FRR) at the crossing)."""
    scores = np.asarray(scores, dtype=np.float64)
    labels = np.asarray(labels)
    order = np.argsort(-scores)                      # descending score = "accept first"
    ls = labels[order]
    n_pos = max(int((labels == 1).sum()), 1)
    n_neg = max(int((labels == 0).sum()), 1)
    tp = np.cumsum(ls == 1)
    fp = np.cumsum(ls == 0)
    far = fp / n_neg                                 # false accept rate
    frr = 1.0 - tp / n_pos                           # false reject rate
    k = int(np.argmin(np.abs(far - frr)))
    return float(max(far[k], frr[k]) * 100.0)


if __name__ == "__main__":
    key = jax.random.PRNGKey(0)
    N, D = 8, 32  # small shapes: batch=8 pairs, embedding dim=32
    x = jax.random.normal(key, (N, 2, D), dtype=jnp.float32)

    nloss, eer = triplet_loss_forward(x, margin=0.0)
    jax.block_until_ready(nloss)
    print("KERNEL_OK")
</pallas_src>

<mosaic_0001>
module attributes {stable_mosaic.version = 11 : i64} {
  func.func @_triplet_dist_kernel(%arg0: i32, %arg1: memref<8x2x32xf32, #tpu.memory_space<vmem>>, %arg2: memref<8x2x32xf32, #tpu.memory_space<vmem>>, %arg3: memref<2x8xf32, #tpu.memory_space<vmem>>) attributes {dimension_semantics = [#tpu.dimension_semantics<parallel>], iteration_bounds = array<i64: 1>, scalar_prefetch = 0 : i64, scratch_operands = 0 : i64, tpu.core_type = #tpu.core_type<tc>, window_params = [{transform_indices = @transform_0, window_bounds = array<i64: 8, 2, 32>}, {pipeline_mode = #tpu.pipeline_mode<synchronous>, transform_indices = @transform_1, window_bounds = array<i64: 8, 2, 32>}, {transform_indices = @transform_2, window_bounds = array<i64: 2, 8>}]} {
    %c0 = arith.constant 0 : index
    %c0_0 = arith.constant 0 : index
    %c0_1 = arith.constant 0 : index
    %0 = vector.load %arg1[%c0, %c0_0, %c0_1] : memref<8x2x32xf32, #tpu.memory_space<vmem>>, vector<8x2x32xf32>
    %c0_2 = arith.constant 0 : index
    %c0_3 = arith.constant 0 : index
    %c0_4 = arith.constant 0 : index
    %1 = vector.load %arg2[%c0_2, %c0_3, %c0_4] : memref<8x2x32xf32, #tpu.memory_space<vmem>>, vector<8x2x32xf32>
    %2 = vector.extract_strided_slice %0 {offsets = [0, 0, 0], sizes = [8, 1, 32], strides = [1, 1, 1]} : vector<8x2x32xf32> to vector<8x1x32xf32>
    %3 = vector.shape_cast %2 : vector<8x1x32xf32> to vector<8x32xf32>
    %4 = vector.extract_strided_slice %0 {offsets = [0, 1, 0], sizes = [8, 1, 32], strides = [1, 1, 1]} : vector<8x2x32xf32> to vector<8x1x32xf32>
    %5 = vector.shape_cast %4 : vector<8x1x32xf32> to vector<8x32xf32>
    %6 = vector.extract_strided_slice %1 {offsets = [0, 1, 0], sizes = [8, 1, 32], strides = [1, 1, 1]} : vector<8x2x32xf32> to vector<8x1x32xf32>
    %7 = vector.shape_cast %6 : vector<8x1x32xf32> to vector<8x32xf32>
    %8 = arith.mulf %3, %3 : vector<8x32xf32>
    %cst = arith.constant dense<0.000000e+00> : vector<8xf32>
    %9 = vector.multi_reduction <add>, %8, %cst [1] : vector<8x32xf32> to vector<8xf32>
    %10 = vector.shape_cast %9 : vector<8xf32> to vector<8x1xf32>
    %11 = math.sqrt %10 : vector<8x1xf32>
    %cst_5 = arith.constant 9.99999996E-13 : f32
    %12 = vector.broadcast %cst_5 : f32 to vector<8x1xf32>
    %13 = arith.maximumf %11, %12 : vector<8x1xf32>
    %14 = vector.broadcast %13 : vector<8x1xf32> to vector<8x32xf32>
    %15 = arith.divf %3, %14 : vector<8x32xf32>
    %16 = arith.mulf %7, %7 : vector<8x32xf32>
    %cst_6 = arith.constant dense<0.000000e+00> : vector<8xf32>
    %17 = vector.multi_reduction <add>, %16, %cst_6 [1] : vector<8x32xf32> to vector<8xf32>
    %18 = vector.shape_cast %17 : vector<8xf32> to vector<8x1xf32>
    %19 = math.sqrt %18 : vector<8x1xf32>
    %cst_7 = arith.constant 9.99999996E-13 : f32
    %20 = vector.broadcast %cst_7 : f32 to vector<8x1xf32>
    %21 = arith.maximumf %19, %20 : vector<8x1xf32>
    %22 = vector.broadcast %21 : vector<8x1xf32> to vector<8x32xf32>
    %23 = arith.divf %7, %22 : vector<8x32xf32>
    %24 = arith.mulf %5, %5 : vector<8x32xf32>
    %cst_8 = arith.constant dense<0.000000e+00> : vector<8xf32>
    %25 = vector.multi_reduction <add>, %24, %cst_8 [1] : vector<8x32xf32> to vector<8xf32>
    %26 = vector.shape_cast %25 : vector<8xf32> to vector<8x1xf32>
    %27 = math.sqrt %26 : vector<8x1xf32>
    %cst_9 = arith.constant 9.99999996E-13 : f32
    %28 = vector.broadcast %cst_9 : f32 to vector<8x1xf32>
    %29 = arith.maximumf %27, %28 : vector<8x1xf32>
    %30 = vector.broadcast %29 : vector<8x1xf32> to vector<8x32xf32>
    %31 = arith.divf %5, %30 : vector<8x32xf32>
    %32 = tpu.transpose %23, [1, 0] : vector<8x32xf32> -> vector<32x8xf32>
    %cst_10 = arith.constant dense<0.000000e+00> : vector<8x8xf32>
    %33 = tpu.matmul %15, %32, %cst_10 {dimension_numbers = #tpu.dot_dimension_numbers<[1], [0], [0], [1], [0, 0, 1, 1], [], []>} : vector<8x32xf32>, vector<32x8xf32>, vector<8x8xf32> -> vector<8x8xf32>
    %34 = arith.mulf %15, %15 : vector<8x32xf32>
    %cst_11 = arith.constant dense<0.000000e+00> : vector<8xf32>
    %35 = vector.multi_reduction <add>, %34, %cst_11 [1] : vector<8x32xf32> to vector<8xf32>
    %36 = vector.shape_cast %35 : vector<8xf32> to vector<8x1xf32>
    %37 = arith.mulf %23, %23 : vector<8x32xf32>
    %cst_12 = arith.constant dense<0.000000e+00> : vector<8xf32>
    %38 = vector.multi_reduction <add>, %37, %cst_12 [1] : vector<8x32xf32> to vector<8xf32>
    %39 = vector.shape_cast %38 : vector<8xf32> to vector<8x1xf32>
    %40 = tpu.transpose %39, [1, 0] : vector<8x1xf32> -> vector<1x8xf32>
    %cst_13 = arith.constant dense<0.000000e+00> : vector<8xf32>
    %41 = vector.multi_reduction <add>, %15, %cst_13 [1] : vector<8x32xf32> to vector<8xf32>
    %42 = vector.shape_cast %41 : vector<8xf32> to vector<8x1xf32>
    %cst_14 = arith.constant dense<0.000000e+00> : vector<8xf32>
    %43 = vector.multi_reduction <add>, %23, %cst_14 [1] : vector<8x32xf32> to vector<8xf32>
    %44 = vector.shape_cast %43 : vector<8xf32> to vector<8x1xf32>
    %45 = tpu.transpose %44, [1, 0] : vector<8x1xf32> -> vector<1x8xf32>
    %46 = vector.broadcast %36 : vector<8x1xf32> to vector<8x8xf32>
    %47 = vector.broadcast %40 : vector<1x8xf32> to vector<8x8xf32>
    %48 = arith.addf %46, %47 : vector<8x8xf32>
    %cst_15 = arith.constant 2.000000e+00 : f32
    %49 = vector.broadcast %cst_15 : f32 to vector<8x8xf32>
    %50 = arith.mulf %49, %33 : vector<8x8xf32>
    %51 = arith.subf %48, %50 : vector<8x8xf32>
    %52 = vector.broadcast %42 : vector<8x1xf32> to vector<8x8xf32>
    %53 = vector.broadcast %45 : vector<1x8xf32> to vector<8x8xf32>
    %54 = arith.subf %52, %53 : vector<8x8xf32>
    %cst_16 = arith.constant 2.000000e-06 : f32
    %55 = vector.broadcast %cst_16 : f32 to vector<8x8xf32>
    %56 = arith.mulf %55, %54 : vector<8x8xf32>
    %57 = arith.addf %51, %56 : vector<8x8xf32>
    %cst_17 = arith.constant 3.200000e-11 : f32
    %58 = vector.broadcast %cst_17 : f32 to vector<8x8xf32>
    %59 = arith.addf %57, %58 : vector<8x8xf32>
    %60 = tpu.iota {dimensions = array<i32: 0>} : vector<8x8xi32>
    %c8_i32 = arith.constant 8 : i32
    %61 = arith.muli %arg0, %c8_i32 : i32
    %62 = vector.broadcast %61 : i32 to vector<8x8xi32>
    %63 = arith.addi %60, %62 : vector<8x8xi32>
    %64 = tpu.iota {dimensions = array<i32: 1>} : vector<8x8xi32>
    %65 = arith.cmpi eq, %63, %64 : vector<8x8xi32>
    %cst_18 = arith.constant 0x7F800000 : f32
    %66 = vector.broadcast %cst_18 : f32 to vector<8x8xf32>
    %67 = arith.select %65, %66, %59 : vector<8x8xi1>, vector<8x8xf32>
    %cst_19 = arith.constant dense<0x7F800000> : vector<8xf32>
    %68 = vector.multi_reduction <minimumf>, %67, %cst_19 [1] : vector<8x8xf32> to vector<8xf32>
    %69 = vector.shape_cast %68 : vector<8xf32> to vector<8x1xf32>
    %cst_20 = arith.constant 0.000000e+00 : f32
    %70 = vector.broadcast %cst_20 : f32 to vector<8x1xf32>
    %71 = arith.maximumf %69, %70 : vector<8x1xf32>
    %72 = math.sqrt %71 : vector<8x1xf32>
    %73 = arith.subf %15, %31 : vector<8x32xf32>
    %cst_21 = arith.constant 9.99999997E-7 : f32
    %74 = vector.broadcast %cst_21 : f32 to vector<8x32xf32>
    %75 = arith.addf %73, %74 : vector<8x32xf32>
    %76 = arith.mulf %75, %75 : vector<8x32xf32>
    %cst_22 = arith.constant dense<0.000000e+00> : vector<8xf32>
    %77 = vector.multi_reduction <add>, %76, %cst_22 [1] : vector<8x32xf32> to vector<8xf32>
    %78 = vector.shape_cast %77 : vector<8xf32> to vector<8x1xf32>
    %79 = math.sqrt %78 : vector<8x1xf32>
    %80 = tpu.concatenate %79, %72 in 1 : vector<8x1xf32>, vector<8x1xf32> -> vector<8x2xf32>
    %81 = tpu.transpose %80, [1, 0] : vector<8x2xf32> -> vector<2x8xf32>
    %c0_23 = arith.constant 0 : index
    %c0_24 = arith.constant 0 : index
    %82 = vector.load %arg3[%c0_23, %c0_24] : memref<2x8xf32, #tpu.memory_space<vmem>>, vector<2x8xf32>
    tpu.vector_store %arg3[%c0_23, %c0_24], %81 {strides = array<i32>} : memref<2x8xf32, #tpu.memory_space<vmem>>, vector<2x8xf32>,
    return
  }
  func.func @transform_0(%arg0: i32) -> (i32, i32, i32) {
    %c0_i32 = arith.constant 0 : i32
    %c0_i32_0 = arith.constant 0 : i32
    %c0_i32_1 = arith.constant 0 : i32
    return %arg0, %c0_i32, %c0_i32_0 : i32, i32, i32
  }
  func.func @transform_1(%arg0: i32) -> (i32, i32, i32) {
    %c0_i32 = arith.constant 0 : i32
    %c0_i32_0 = arith.constant 0 : i32
    %c0_i32_1 = arith.constant 0 : i32
    %c0_i32_2 = arith.constant 0 : i32
    return %c0_i32, %c0_i32_0, %c0_i32_1 : i32, i32, i32
  }
  func.func @transform_2(%arg0: i32) -> (i32, i32) {
    %c0_i32 = arith.constant 0 : i32
    %c0_i32_0 = arith.constant 0 : i32
    return %c0_i32, %arg0 : i32, i32
  }
}

</mosaic_0001>

<llo_original>
// kernel: tpu_custom_call.1
$region0: #{tpu_custom_call.1}
  #allocation0 [shape = 'u32[]', space=smem, size = 0x4, offset = 0x4, fixed_abs, tag = 'smem constant byte address 0x4 - core index']
  #allocation1 [shape = 'u32[144,128]{1,0:T(1,128)}', space=vmem, size = 0x12000, scoped, tag = 'internal scratch']
  %s0 = inlined_call_operand.hbm [shape: f32[8,2,32], index: 0, kind: input, shape index: {}]
  %s1 = inlined_call_operand.hbm [shape: f32[8,2,32], index: 1, kind: input, shape index: {}]
  %s2 = inlined_call_operand.hbm [shape: f32[2,8], index: 2, kind: output, shape index: {}]
  %s3 = sld [smem:[#allocation0]]
  $region26: #{tpu_custom_call.1} parent=0
    _
  %s5 = ssub.s32 1, %s3
  %s6 = scalar_select 0, %s5, %s3
  $region1: #{tpu_custom_call.1} parent=0
    #allocation2 [shape = 'u8[8192]{0}', space=vmem, size = 0x2000, scoped, tag = 'input window, operand 0, single buffered']
    #allocation3 [shape = 's32[1]{0}', space=sflag, size = 0x4, scoped, tag = 'scoped memory for tpu_custom_call.1']
    #allocation4 [shape = 's32[1]{0}', space=sflag, size = 0x4, scoped, tag = 'scoped memory for tpu_custom_call.1']
    #allocation5 [shape = 'u8[8192]{0}', space=vmem, size = 0x2000, scoped, tag = 'input window, operand 1, single buffered']
    #allocation6 [shape = 's32[1]{0}', space=sflag, size = 0x4, scoped, tag = 'scoped memory for tpu_custom_call.1']
    #allocation7 [shape = 'u8[1024]{0}', space=vmem, size = 0x400, scoped, tag = 'output window, operand 0, single buffered']
    %7 = vsyncpa [#allocation3], 0
    %8 = vsyncpa [#allocation6], 0
    %9 = vsyncpa [#allocation4], 0
    // Predicated region
    $region2: #{tpu_custom_call.1} parent=1 // pred_check
      _
    $region3: #{tpu_custom_call.1} parent=1 // pred_check_branch
      %11 = sbr.rel (0) target = $region5
    $region4: #{tpu_custom_call.1} parent=1 // pred_region
      %s13 = ssub.s32 256, 256
      %14 = vsyncadd [#allocation3], %s13
      %s15 = sshll.u32 [#allocation2], 4
      %s16 = int_to_ptr.vmem [resolvable:$true] %s15
      %21 = dma.hbm_to_vmem [thread:$0]  %s0, 256, %s16, [#allocation3], 32, 32, 2
    $region5: #{tpu_custom_call.1} parent=1 // pred_fallthru
      _
    // Predicated region
    $region6: #{tpu_custom_call.1} parent=1 // pred_check
      _
    $region7: #{tpu_custom_call.1} parent=1 // pred_check_branch
      %23 = sbr.rel (0) target = $region9
    $region8: #{tpu_custom_call.1} parent=1 // pred_region
      %s25 = ssub.s32 256, 256
      %26 = vsyncadd [#allocation6], %s25
      %s27 = sshll.u32 [#allocation5], 4
      %s28 = int_to_ptr.vmem [resolvable:$true] %s27
      %33 = dma.hbm_to_vmem [thread:$0]  %s1, 256, %s28, [#allocation6], 32, 32, 2
    $region9: #{tpu_custom_call.1} parent=1 // pred_fallthru
      _
    // Predicated region
    $region10: #{tpu_custom_call.1} parent=1 // pred_check
      _
    $region11: #{tpu_custom_call.1} parent=1 // pred_check_branch
      %35 = sbr.rel (0) target = $region13
    $region12: #{tpu_custom_call.1} parent=1 // pred_region
      %36 = dma.done [#allocation3], 256
    $region13: #{tpu_custom_call.1} parent=1 // pred_fallthru
      _
    // Predicated region
    $region14: #{tpu_custom_call.1} parent=1 // pred_check
      _
    $region15: #{tpu_custom_call.1} parent=1 // pred_check_branch
      %38 = sbr.rel (0) target = $region17
    $region16: #{tpu_custom_call.1} parent=1 // pred_region
      %39 = dma.done [#allocation6], 256
    $region17: #{tpu_custom_call.1} parent=1 // pred_fallthru
      _
    %v40 = vld [vmem:[#allocation2] sm:$0x3]
    %v41 = vld [vmem:[#allocation2 + $0x2] sm:$0x3]
    %v42 = vld [vmem:[#allocation2 + $0x4] sm:$0x3]
    %v43 = vld [vmem:[#allocation2 + $0x6] sm:$0x3]
    %v44 = vld [vmem:[#allocation2 + $0x8] sm:$0x3]
    %v45 = vld [vmem:[#allocation2 + $0xa] sm:$0x3]
    %v46 = vld [vmem:[#allocation2 + $0xc] sm:$0x3]
    %v47 = vld [vmem:[#allocation2 + $0xe] sm:$0x3]
    %v48 = vld [vmem:[#allocation5] sm:$0x3]
    %v49 = vld [vmem:[#allocation5 + $0x2] sm:$0x3]
    %v50 = vld [vmem:[#allocation5 + $0x4] sm:$0x3]
    %v51 = vld [vmem:[#allocation5 + $0x6] sm:$0x3]
    %v52 = vld [vmem:[#allocation5 + $0x8] sm:$0x3]
    %v53 = vld [vmem:[#allocation5 + $0xa] sm:$0x3]
    %v54 = vld [vmem:[#allocation5 + $0xc] sm:$0x3]
    %v55 = vld [vmem:[#allocation5 + $0xe] sm:$0x3]
    %v56 = vmul.f32 %v40, %v40
    %v57 = vmul.f32 %v41, %v41
    %v58 = vmul.f32 %v42, %v42
    %v59 = vmul.f32 %v43, %v43
    %v60 = vmul.f32 %v44, %v44
    %v61 = vmul.f32 %v45, %v45
    %v62 = vmul.f32 %v46, %v46
    %v63 = vmul.f32 %v47, %v47
    %v72 = vrot.slane %v57, 7
    %vm73 = vcmask 1041409
    %v74 = vsel %vm73, %v72, %v56
    %v75 = vrot.slane %v58, 6
    %vm76 = vcmask 1042434
    %v77 = vsel %vm76, %v75, %v74
    %v78 = vrot.slane %v59, 5
    %vm79 = vcmask 1043459
    %v80 = vsel %vm79, %v78, %v77
    %v81 = vrot.slane %v60, 4
    %vm82 = vcmask 1044484
    %v83 = vsel %vm82, %v81, %v80
    %v84 = vrot.slane %v61, 3
    %vm85 = vcmask 1045509
    %v86 = vsel %vm85, %v84, %v83
    %v87 = vrot.slane %v62, 2
    %vm88 = vcmask 1046534
    %v89 = vsel %vm88, %v87, %v86
    %v90 = vrot.slane %v63, 1
    %vm91 = vcmask 1047559
    %v92 = vsel %vm91, %v90, %v89
    %vm94 = vcmask 261120
    %v95 = vsel %vm94, %v92, 0.0
    %96 = vadd.xlane.f32.xlu0 %v95
    %v97 = vpop.xlane.xlu0 %96
    %v98 = vrsqrt.pop %v97
    %v99 = vmul.f32 %v97, %v98
    %vm100 = vcmp.eq.f32.partialorder %v97, inf
    %v101 = vsel %vm100, %v97, %v99
    %vm102 = vcmp.eq.f32.partialorder %v97, 0.0
    %v103 = vand.u32 %v97, 2147483648
    %v104 = vsel %vm102, %v103, %v101
    %v105 = vmax.f32 %v104, 1e-12
    %v107 = vrot.slane %v105, 1
    %v108 = vrot.slane %v105, 2
    %v109 = vrot.slane %v105, 3
    %v110 = vrot.slane %v105, 4
    %v111 = vrot.slane %v105, 5
    %v112 = vrot.slane %v105, 6
    %v113 = vrot.slane %v105, 7
    %v122 = vrcp.pop %v105
    %v123 = vmul.f32 %v40, %v122
    %v124 = vrcp.pop %v107
    %v125 = vmul.f32 %v41, %v124
    %v126 = vrcp.pop %v108
    %v127 = vmul.f32 %v42, %v126
    %v128 = vrcp.pop %v109
    %v129 = vmul.f32 %v43, %v128
    %v130 = vrcp.pop %v110
    %v131 = vmul.f32 %v44, %v130
    %v132 = vrcp.pop %v111
    %v133 = vmul.f32 %v45, %v132
    %v134 = vrcp.pop %v112
    %v135 = vmul.f32 %v46, %v134
    %v136 = vrcp.pop %v113
    %v137 = vmul.f32 %v47, %v136
    %v138 = vmul.f32 %v48, %v48
    %v139 = vmul.f32 %v49, %v49
    %v140 = vmul.f32 %v50, %v50
    %v141 = vmul.f32 %v51, %v51
    %v142 = vmul.f32 %v52, %v52
    %v143 = vmul.f32 %v53, %v53
    %v144 = vmul.f32 %v54, %v54
    %v145 = vmul.f32 %v55, %v55
    %v154 = vrot.slane %v139, 7
    %v155 = vsel %vm76, %v154, %v138
    %v156 = vrot.slane %v140, 6
    %v157 = vsel %vm79, %v156, %v155
    %v158 = vrot.slane %v141, 5
    %v159 = vsel %vm82, %v158, %v157
    %v160 = vrot.slane %v142, 4
    %v161 = vsel %vm85, %v160, %v159
    %v162 = vrot.slane %v143, 3
    %v163 = vsel %vm88, %v162, %v161
    %v164 = vrot.slane %v144, 2
    %v165 = vsel %vm91, %v164, %v163
    %v166 = vrot.slane %v145, 1
    %vm169 = vcmask 261121
    %v170 = vsel %vm169, %v165, 0.0
    %171 = vadd.xlane.f32.xlu0 %v170
    %v172 = vpop.xlane.xlu0 %171
    %vm173 = vcmask 253952
    %v174 = vsel %vm173, %v166, 0.0
    %175 = vadd.xlane.f32.xlu0 %v174
    %v176 = vpop.xlane.xlu0 %175
    %v177 = vrsqrt.pop %v172
    %v178 = vmul.f32 %v172, %v177
    %vm179 = vcmp.eq.f32.partialorder %v172, inf
    %v180 = vsel %vm179, %v172, %v178
    %vm181 = vcmp.eq.f32.partialorder %v172, 0.0
    %v182 = vand.u32 %v172, 2147483648
    %v183 = vsel %vm181, %v182, %v180
    %v184 = vrsqrt.pop %v176
    %v185 = vmul.f32 %v176, %v184
    %vm186 = vcmp.eq.f32.partialorder %v176, inf
    %v187 = vsel %vm186, %v176, %v185
    %vm188 = vcmp.eq.f32.partialorder %v176, 0.0
    %v189 = vand.u32 %v176, 2147483648
    %v190 = vsel %vm188, %v189, %v187
    %v191 = vmax.f32 %v183, 1e-12
    %v192 = vmax.f32 %v190, 1e-12
    %v195 = vrot.slane %v191, 1
    %v196 = vrot.slane %v191, 2
    %v197 = vrot.slane %v191, 3
    %v198 = vrot.slane %v191, 4
    %v199 = vrot.slane %v191, 5
    %v200 = vrot.slane %v191, 6
    %v201 = vrot.slane %v192, 7
    %v210 = vrcp.pop %v191
    %v211 = vmul.f32 %v48, %v210
    %v212 = vrcp.pop %v195
    %v213 = vmul.f32 %v49, %v212
    %v214 = vrcp.pop %v196
    %v215 = vmul.f32 %v50, %v214
    %v216 = vrcp.pop %v197
    %v217 = vmul.f32 %v51, %v216
    %v218 = vrcp.pop %v198
    %v219 = vmul.f32 %v52, %v218
    %v220 = vrcp.pop %v199
    %v221 = vmul.f32 %v53, %v220
    %v222 = vrcp.pop %v200
    %v223 = vmul.f32 %v54, %v222
    %v224 = vrcp.pop %v201
    %v225 = vmul.f32 %v55, %v224
    %v226 = vsel %vm76, %v72, %v56
    %v227 = vsel %vm79, %v75, %v226
    %v228 = vsel %vm82, %v78, %v227
    %v229 = vsel %vm85, %v81, %v228
    %v230 = vsel %vm88, %v84, %v229
    %v231 = vsel %vm91, %v87, %v230
    %v234 = vsel %vm169, %v231, 0.0
    %235 = vadd.xlane.f32.xlu0 %v234
    %v236 = vpop.xlane.xlu0 %235
    %v237 = vsel %vm173, %v90, 0.0
    %238 = vadd.xlane.f32.xlu0 %v237
    %v239 = vpop.xlane.xlu0 %238
    %v240 = vrsqrt.pop %v236
    %v241 = vmul.f32 %v236, %v240
    %vm242 = vcmp.eq.f32.partialorder %v236, inf
    %v243 = vsel %vm242, %v236, %v241
    %vm244 = vcmp.eq.f32.partialorder %v236, 0.0
    %v245 = vand.u32 %v236, 2147483648
    %v246 = vsel %vm244, %v245, %v243
    %v247 = vrsqrt.pop %v239
    %v248 = vmul.f32 %v239, %v247
    %vm249 = vcmp.eq.f32.partialorder %v239, inf
    %v250 = vsel %vm249, %v239, %v248
    %vm251 = vcmp.eq.f32.partialorder %v239, 0.0
    %v252 = vand.u32 %v239, 2147483648
    %v253 = vsel %vm251, %v252, %v250
    %v254 = vmax.f32 %v246, 1e-12
    %v255 = vmax.f32 %v253, 1e-12
    %v258 = vrot.slane %v254, 1
    %v259 = vrot.slane %v254, 2
    %v260 = vrot.slane %v254, 3
    %v261 = vrot.slane %v254, 4
    %v262 = vrot.slane %v254, 5
    %v263 = vrot.slane %v254, 6
    %v264 = vrot.slane %v255, 7
    %v273 = vrcp.pop %v254
    %v274 = vmul.f32 %v40, %v273
    %v275 = vrcp.pop %v258
    %v276 = vmul.f32 %v41, %v275
    %v277 = vrcp.pop %v259
    %v278 = vmul.f32 %v42, %v277
    %v279 = vrcp.pop %v260
    %v280 = vmul.f32 %v43, %v279
    %v281 = vrcp.pop %v261
    %v282 = vmul.f32 %v44, %v281
    %v283 = vrcp.pop %v262
    %v284 = vmul.f32 %v45, %v283
    %v285 = vrcp.pop %v263
    %v286 = vmul.f32 %v46, %v285
    %v287 = vrcp.pop %v264
    %v288 = vmul.f32 %v47, %v287
    %v297 = vrot.slane %v125, 7
    %v298 = vsel %vm73, %v297, %v123
    %v299 = vrot.slane %v127, 6
    %v300 = vsel %vm76, %v299, %v298
    %v301 = vrot.slane %v129, 5
    %v302 = vsel %vm79, %v301, %v300
    %v303 = vrot.slane %v131, 4
    %v304 = vsel %vm82, %v303, %v302
    %v305 = vrot.slane %v133, 3
    %v306 = vsel %vm85, %v305, %v304
    %v307 = vrot.slane %v135, 2
    %v308 = vsel %vm88, %v307, %v306
    %v309 = vrot.slane %v137, 1
    %v310 = vsel %vm91, %v309, %v308
    %v319 = vrot.slane %v211, 1
    %v320 = vsel %vm73, %v213, %v319
    %v321 = vrot.slane %v215, 7
    %v322 = vsel %vm76, %v321, %v320
    %v323 = vrot.slane %v217, 6
    %v324 = vsel %vm79, %v323, %v322
    %v325 = vrot.slane %v219, 5
    %v326 = vsel %vm82, %v325, %v324
    %v327 = vrot.slane %v221, 4
    %v328 = vsel %vm85, %v327, %v326
    %v329 = vrot.slane %v223, 3
    %v330 = vsel %vm88, %v329, %v328
    %v331 = vrot.slane %v225, 2
    %v332 = vsel %vm91, %v331, %v330
    %v333 = vsel %vm94, %v310, 0
    %v335 = vsel %vm94, %v332, 0
    %337 = vmatprep.subr.mxu0 0.0
    %338 = vmatpush1.xpose.msra.mxu0 %v335
    %339 = vmatprep.subr.mxu0 0.0
    %340 = vmatpush1.xpose.msra.mxu0 0.0
    %341 = vmatprep.subr.mxu0 0.0
    %342 = vmatpush1.xpose.msra.mxu0 0.0
    %343 = vmatprep.subr.mxu0 0.0
    %344 = vmatpush1.xpose.msra.mxu0 0.0
    %345 = vmatprep.subr.mxu0 0.0
    %346 = vmatpush1.xpose.msra.mxu0 0.0
    %347 = vmatprep.subr.mxu0 0.0
    %348 = vmatpush1.xpose.msra.mxu0 0.0
    %349 = vmatprep.subr.mxu0 0.0
    %350 = vmatpush1.xpose.msra.mxu0 0.0
    %351 = vmatprep.subr.mxu0 0.0
    %352 = vmatpush1.xpose.msra.mxu0 0.0
    %353 = vmatprep.subr.mxu0 0.0
    %354 = vmatpush1.xpose.msra.mxu0 0.0
    %355 = vmatprep.subr.mxu0 0.0
    %356 = vmatpush1.xpose.msra.mxu0 0.0
    %357 = vmatprep.subr.mxu0 0.0
    %358 = vmatpush1.xpose.msra.mxu0 0.0
    %359 = vmatprep.subr.mxu0 0.0
    %360 = vmatpush1.xpose.msra.mxu0 0.0
    %361 = vmatprep.subr.mxu0 0.0
    %362 = vmatpush1.xpose.msra.mxu0 0.0
    %363 = vmatprep.subr.mxu0 0.0
    %364 = vmatpush1.xpose.msra.mxu0 0.0
    %365 = vmatprep.subr.mxu0 0.0
    %366 = vmatpush1.xpose.msra.mxu0 0.0
    %367 = vmatprep.subr.mxu0 0.0
    %368 = vmatpush1.xpose.msra.mxu0 0.0
    %369 = vmatprep.subr.mxu0 0.0
    %370 = vmatpush1.xpose.msra.mxu0 0.0
    %371 = vmatprep.subr.mxu0 0.0
    %372 = vmatpush1.xpose.msra.mxu0 0.0
    %373 = vmatprep.subr.mxu0 0.0
    %374 = vmatpush1.xpose.msra.mxu0 0.0
    %375 = vmatprep.subr.mxu0 0.0
    %376 = vmatpush1.xpose.msra.mxu0 0.0
    %377 = vmatprep.subr.mxu0 0.0
    %378 = vmatpush1.xpose.msra.mxu0 0.0
    %379 = vmatprep.subr.mxu0 0.0
    %380 = vmatpush1.xpose.msra.mxu0 0.0
    %381 = vmatprep.subr.mxu0 0.0
    %382 = vmatpush1.xpose.msra.mxu0 0.0
    %383 = vmatprep.subr.mxu0 0.0
    %384 = vmatpush1.xpose.msra.mxu0 0.0
    %385 = vmatprep.subr.mxu0 0.0
    %386 = vmatpush1.xpose.msra.mxu0 0.0
    %387 = vmatprep.subr.mxu0 0.0
    %388 = vmatpush1.xpose.msra.mxu0 0.0
    %389 = vmatprep.subr.mxu0 0.0
    %390 = vmatpush1.xpose.msra.mxu0 0.0
    %391 = vmatprep.subr.mxu0 0.0
    %392 = vmatpush1.xpose.msra.mxu0 0.0
    %393 = vmatprep.subr.mxu0 0.0
    %394 = vmatpush1.xpose.msra.mxu0 0.0
    %395 = vmatprep.subr.mxu0 0.0
    %396 = vmatpush1.xpose.msra.mxu0 0.0
    %397 = vmatprep.subr.mxu0 0.0
    %398 = vmatpush1.xpose.msra.mxu0 0.0
    %399 = vmatprep.subr.mxu0 0.0
    %400 = vmatpush1.xpose.msra.mxu0 0.0
    %401 = vmatprep.mubr.f32.mxu0 0.0
    %402 = vmatmul.mubr.f32.gmra.mrb[0].mxu0 %v333
    %v403 = vpop.f32.mrb[0].mxu0
    %v404 = vadd.f32 0.0, %v403
    %v405 = vpop.f32.mrb[0].mxu0
    %406 = vdwg.mxu0
    %v407 = vmul.f32 %v123, %v123
    %v408 = vmul.f32 %v125, %v125
    %v409 = vmul.f32 %v127, %v127
    %v410 = vmul.f32 %v129, %v129
    %v411 = vmul.f32 %v131, %v131
    %v412 = vmul.f32 %v133, %v133
    %v413 = vmul.f32 %v135, %v135
    %v414 = vmul.f32 %v137, %v137
    %v423 = vrot.slane %v408, 7
    %v424 = vsel %vm73, %v423, %v407
    %v425 = vrot.slane %v409, 6
    %v426 = vsel %vm76, %v425, %v424
    %v427 = vrot.slane %v410, 5
    %v428 = vsel %vm79, %v427, %v426
    %v429 = vrot.slane %v411, 4
    %v430 = vsel %vm82, %v429, %v428
    %v431 = vrot.slane %v412, 3
    %v432 = vsel %vm85, %v431, %v430
    %v433 = vrot.slane %v413, 2
    %v434 = vsel %vm88, %v433, %v432
    %v435 = vrot.slane %v414, 1
    %v436 = vsel %vm91, %v435, %v434
    %v438 = vsel %vm94, %v436, 0.0
    %439 = vadd.xlane.f32.xlu0 %v438
    %v440 = vpop.xlane.xlu0 %439
    %v441 = vmul.f32 %v211, %v211
    %v442 = vmul.f32 %v213, %v213
    %v443 = vmul.f32 %v215, %v215
    %v444 = vmul.f32 %v217, %v217
    %v445 = vmul.f32 %v219, %v219
    %v446 = vmul.f32 %v221, %v221
    %v447 = vmul.f32 %v223, %v223
    %v448 = vmul.f32 %v225, %v225
    %v457 = vrot.slane %v442, 7
    %v458 = vsel %vm76, %v457, %v441
    %v459 = vrot.slane %v443, 6
    %v460 = vsel %vm79, %v459, %v458
    %v461 = vrot.slane %v444, 5
    %v462 = vsel %vm82, %v461, %v460
    %v463 = vrot.slane %v445, 4
    %v464 = vsel %vm85, %v463, %v462
    %v465 = vrot.slane %v446, 3
    %v466 = vsel %vm88, %v465, %v464
    %v467 = vrot.slane %v447, 2
    %v468 = vsel %vm91, %v467, %v466
    %v469 = vrot.slane %v448, 1
    %v472 = vsel %vm169, %v468, 0.0
    %473 = vadd.xlane.f32.xlu0 %v472
    %v474 = vpop.xlane.xlu0 %473
    %v475 = vsel %vm173, %v469, 0.0
    %476 = vadd.xlane.f32.xlu0 %v475
    %v477 = vpop.xlane.xlu0 %476
    %vm480 = vcmask 1046528
    %v481 = vrot.slane %v474, 1
    %v482 = vrot.slane %v477, 1
    %v483 = vsel %vm480, %v481, %v482
    %485 = vxpose.xlu0.b32.start [1/16] %v483, 128
    %486 = vxpose.xlu0.b32.cont [2/16] 0.0, 128
    %487 = vxpose.xlu0.b32.cont [3/16] 0.0, 128
    %488 = vxpose.xlu0.b32.cont [4/16] 0.0, 128
    %489 = vxpose.xlu0.b32.cont [5/16] 0.0, 128
    %490 = vxpose.xlu0.b32.cont [6/16] 0.0, 128
    %491 = vxpose.xlu0.b32.cont [7/16] 0.0, 128
    %492 = vxpose.xlu0.b32.cont [8/16] 0.0, 128
    %493 = vxpose.xlu0.b32.cont [9/16] 0.0, 128
    %494 = vxpose.xlu0.b32.cont [10/16] 0.0, 128
    %495 = vxpose.xlu0.b32.cont [11/16] 0.0, 128
    %496 = vxpose.xlu0.b32.cont [12/16] 0.0, 128
    %497 = vxpose.xlu0.b32.cont [13/16] 0.0, 128
    %498 = vxpose.xlu0.b32.cont [14/16] 0.0, 128
    %499 = vxpose.xlu0.b32.cont [15/16] 0.0, 128
    %500 = vxpose.xlu0.b32.end [16/16] 0.0, 128
    %v501 = vpop.trf.xlu0
    %v502 = vpop.trf.xlu0
    %v503 = vpop.trf.xlu0
    %v504 = vpop.trf.xlu0
    %v505 = vpop.trf.xlu0
    %v506 = vpop.trf.xlu0
    %v507 = vpop.trf.xlu0
    %v508 = vpop.trf.xlu0
    %v509 = vpop.trf.xlu0
    %v510 = vpop.trf.xlu0
    %v511 = vpop.trf.xlu0
    %v512 = vpop.trf.xlu0
    %v513 = vpop.trf.xlu0
    %v514 = vpop.trf.xlu0
    %v515 = vpop.trf.xlu0
    %v516 = vpop.trf.xlu0
    %v518 = vsel %vm94, %v310, 0.0
    %519 = vadd.xlane.f32.xlu0 %v518
    %v520 = vpop.xlane.xlu0 %519
    %v521 = vrot.slane %v213, 7
    %v522 = vsel %vm76, %v521, %v211
    %v523 = vrot.slane %v215, 6
    %v524 = vsel %vm79, %v523, %v522
    %v525 = vrot.slane %v217, 5
    %v526 = vsel %vm82, %v525, %v524
    %v527 = vrot.slane %v219, 4
    %v528 = vsel %vm85, %v527, %v526
    %v529 = vrot.slane %v221, 3
    %v530 = vsel %vm88, %v529, %v528
    %v531 = vrot.slane %v223, 2
    %v532 = vsel %vm91, %v531, %v530
    %v533 = vrot.slane %v225, 1
    %v536 = vsel %vm169, %v532, 0.0
    %537 = vadd.xlane.f32.xlu0 %v536
    %v538 = vpop.xlane.xlu0 %537
    %v539 = vsel %vm173, %v533, 0.0
    %540 = vadd.xlane.f32.xlu0 %v539
    %v541 = vpop.xlane.xlu0 %540
    %v544 = vrot.slane %v538, 1
    %v545 = vrot.slane %v541, 1
    %v546 = vsel %vm480, %v544, %v545
    %548 = vxpose.xlu0.b32.start [1/16] %v546, 128
    %549 = vxpose.xlu0.b32.cont [2/16] 0.0, 128
    %550 = vxpose.xlu0.b32.cont [3/16] 0.0, 128
    %551 = vxpose.xlu0.b32.cont [4/16] 0.0, 128
    %552 = vxpose.xlu0.b32.cont [5/16] 0.0, 128
    %553 = vxpose.xlu0.b32.cont [6/16] 0.0, 128
    %554 = vxpose.xlu0.b32.cont [7/16] 0.0, 128
    %555 = vxpose.xlu0.b32.cont [8/16] 0.0, 128
    %556 = vxpose.xlu0.b32.cont [9/16] 0.0, 128
    %557 = vxpose.xlu0.b32.cont [10/16] 0.0, 128
    %558 = vxpose.xlu0.b32.cont [11/16] 0.0, 128
    %559 = vxpose.xlu0.b32.cont [12/16] 0.0, 128
    %560 = vxpose.xlu0.b32.cont [13/16] 0.0, 128
    %561 = vxpose.xlu0.b32.cont [14/16] 0.0, 128
    %562 = vxpose.xlu0.b32.cont [15/16] 0.0, 128
    %563 = vxpose.xlu0.b32.end [16/16] 0.0, 128
    %v564 = vpop.trf.xlu0
    %v565 = vpop.trf.xlu0
    %v566 = vpop.trf.xlu0
    %v567 = vpop.trf.xlu0
    %v568 = vpop.trf.xlu0
    %v569 = vpop.trf.xlu0
    %v570 = vpop.trf.xlu0
    %v571 = vpop.trf.xlu0
    %v572 = vpop.trf.xlu0
    %v573 = vpop.trf.xlu0
    %v574 = vpop.trf.xlu0
    %v575 = vpop.trf.xlu0
    %v576 = vpop.trf.xlu0
    %v577 = vpop.trf.xlu0
    %v578 = vpop.trf.xlu0
    %v579 = vpop.trf.xlu0
    %v580 = vlaneseq
    %v581 = vshrl.u32 %v580, 7
    %v582 = vsub.s32 0, %v581
    %v583 = vrot.slane %v501, %v582
    %v584 = vadd.f32 %v440, %v583
    %v585 = vmul.f32 %v404, 2.0
    %v586 = vsub.f32 %v584, %v585
    %v587 = vlaneseq
    %v588 = vshrl.u32 %v587, 7
    %v589 = vsub.s32 0, %v588
    %v590 = vrot.slane %v564, %v589
    %v591 = vsub.f32 %v520, %v590
    %v592 = vmul.f32 %v591, 2e-06
    %v593 = vadd.f32 %v586, %v592
    %v594 = vadd.f32 %v593, 3.2e-11
    %v595 = vlaneseq
    %v596 = vshrl.u32 %v595, 7
    %s597 = smul.u32 0, 8
    %v598 = vstv %s597
    %v599 = vadd.s32 %v596, %v598
    %v600 = vlaneseq
    %v601 = vand.u32 %v600, 127
    %vm602 = vcmp.eq.s32.totalorder %v599, %v601
    %v603 = vsel %vm602, inf, %v594
    %vm604 = vcmask 64512
    %v605 = vsel %vm604, %v603, inf
    %606 = vmin.xlane.f32.xlu0 %v605
    %v607 = vpop.xlane.xlu0 %606
    %v608 = vmax.f32 %v607, 0.0
    %v609 = vrsqrt.pop %v608
    %v610 = vmul.f32 %v608, %v609
    %vm611 = vcmp.eq.f32.partialorder %v608, inf
    %v612 = vsel %vm611, %v608, %v610
    %vm613 = vcmp.eq.f32.partialorder %v608, 0.0
    %v614 = vand.u32 %v608, 2147483648
    %v615 = vsel %vm613, %v614, %v612
    %v624 = vrot.slane %v274, 1
    %v625 = vrot.slane %v276, 1
    %v626 = vrot.slane %v278, 1
    %v627 = vrot.slane %v280, 1
    %v628 = vrot.slane %v282, 1
    %v629 = vrot.slane %v284, 1
    %v630 = vrot.slane %v286, 1
    %v631 = vrot.slane %v288, 1
    %v640 = vsub.f32 %v123, %v624
    %v641 = vsub.f32 %v125, %v625
    %v642 = vsub.f32 %v127, %v626
    %v643 = vsub.f32 %v129, %v627
    %v644 = vsub.f32 %v131, %v628
    %v645 = vsub.f32 %v133, %v629
    %v646 = vsub.f32 %v135, %v630
    %v647 = vsub.f32 %v137, %v631
    %v648 = vadd.f32 %v640, 1e-06
    %v649 = vadd.f32 %v641, 1e-06
    %v650 = vadd.f32 %v642, 1e-06
    %v651 = vadd.f32 %v643, 1e-06
    %v652 = vadd.f32 %v644, 1e-06
    %v653 = vadd.f32 %v645, 1e-06
    %v654 = vadd.f32 %v646, 1e-06
    %v655 = vadd.f32 %v647, 1e-06
    %v656 = vmul.f32 %v648, %v648
    %v657 = vmul.f32 %v649, %v649
    %v658 = vmul.f32 %v650, %v650
    %v659 = vmul.f32 %v651, %v651
    %v660 = vmul.f32 %v652, %v652
    %v661 = vmul.f32 %v653, %v653
    %v662 = vmul.f32 %v654, %v654
    %v663 = vmul.f32 %v655, %v655
    %v672 = vrot.slane %v657, 7
    %v673 = vsel %vm73, %v672, %v656
    %v674 = vrot.slane %v658, 6
    %v675 = vsel %vm76, %v674, %v673
    %v676 = vrot.slane %v659, 5
    %v677 = vsel %vm79, %v676, %v675
    %v678 = vrot.slane %v660, 4
    %v679 = vsel %vm82, %v678, %v677
    %v680 = vrot.slane %v661, 3
    %v681 = vsel %vm85, %v680, %v679
    %v682 = vrot.slane %v662, 2
    %v683 = vsel %vm88, %v682, %v681
    %v684 = vrot.slane %v663, 1
    %v685 = vsel %vm91, %v684, %v683
    %v687 = vsel %vm94, %v685, 0.0
    %688 = vadd.xlane.f32.xlu0 %v687
    %v689 = vpop.xlane.xlu0 %688
    %v690 = vrsqrt.pop %v689
    %v691 = vmul.f32 %v689, %v690
    %vm692 = vcmp.eq.f32.partialorder %v689, inf
    %v693 = vsel %vm692, %v689, %v691
    %vm694 = vcmp.eq.f32.partialorder %v689, 0.0
    %v695 = vand.u32 %v689, 2147483648
    %v696 = vsel %vm694, %v695, %v693
    %vm697 = vcmask 7168
    %v698 = vsel %vm697, %v696, %v615
    %699 = vxpose.xlu0.b32.start [1/16] %v698, 128
    %700 = vxpose.xlu0.b32.cont [2/16] 0.0, 128
    %701 = vxpose.xlu0.b32.cont [3/16] 0.0, 128
    %702 = vxpose.xlu0.b32.cont [4/16] 0.0, 128
    %703 = vxpose.xlu0.b32.cont [5/16] 0.0, 128
    %704 = vxpose.xlu0.b32.cont [6/16] 0.0, 128
    %705 = vxpose.xlu0.b32.cont [7/16] 0.0, 128
    %706 = vxpose.xlu0.b32.cont [8/16] 0.0, 128
    %707 = vxpose.xlu0.b32.cont [9/16] 0.0, 128
    %708 = vxpose.xlu0.b32.cont [10/16] 0.0, 128
    %709 = vxpose.xlu0.b32.cont [11/16] 0.0, 128
    %710 = vxpose.xlu0.b32.cont [12/16] 0.0, 128
    %711 = vxpose.xlu0.b32.cont [13/16] 0.0, 128
    %712 = vxpose.xlu0.b32.cont [14/16] 0.0, 128
    %713 = vxpose.xlu0.b32.cont [15/16] 0.0, 128
    %714 = vxpose.xlu0.b32.end [16/16] 0.0, 128
    %v715 = vpop.trf.xlu0
    %v716 = vpop.trf.xlu0
    %v717 = vpop.trf.xlu0
    %v718 = vpop.trf.xlu0
    %v719 = vpop.trf.xlu0
    %v720 = vpop.trf.xlu0
    %v721 = vpop.trf.xlu0
    %v722 = vpop.trf.xlu0
    %v723 = vpop.trf.xlu0
    %v724 = vpop.trf.xlu0
    %v725 = vpop.trf.xlu0
    %v726 = vpop.trf.xlu0
    %v727 = vpop.trf.xlu0
    %v728 = vpop.trf.xlu0
    %v729 = vpop.trf.xlu0
    %v730 = vpop.trf.xlu0
    %vm731 = vcmask 58368
    %732 = vst.msk [vmem:[#allocation7] sm:$0x3] %vm731, %v715
    // Predicated region
    $region18: #{tpu_custom_call.1} parent=1 // pred_check
      _
    $region19: #{tpu_custom_call.1} parent=1 // pred_check_branch
      %734 = sbr.rel (0) target = $region21
    $region20: #{tpu_custom_call.1} parent=1 // pred_region
      %s736 = ssub.s32 32, 32
      %737 = vsyncadd [#allocation4], %s736
      %s739 = sshll.u32 [#allocation7], 4
      %s740 = int_to_ptr.vmem [resolvable:$true] %s739
      %742 = dma.vmem_to_hbm [thread:$0]  %s740, 32, %s2, [#allocation4]
    $region21: #{tpu_custom_call.1} parent=1 // pred_fallthru
      _
    // Predicated region
    $region22: #{tpu_custom_call.1} parent=1 // pred_check
      _
    $region23: #{tpu_custom_call.1} parent=1 // pred_check_branch
      %744 = sbr.rel (0) target = $region25
    $region24: #{tpu_custom_call.1} parent=1 // pred_region
      %745 = dma.done [#allocation4], 32
    $region25: #{tpu_custom_call.1} parent=1 // pred_fallthru
      _
    %746 = vsyncpa [#allocation3], 1
    %747 = vsyncpa [#allocation6], 1
    %748 = vsyncpa [#allocation4], 1

</llo_original>
